<compile_context>
chip_gen: v6e
topology: v6e:2x2x1
jax: 0.10.0
libtpu: 0.0.40
codegen_flags: <defaults>
</compile_context>

<pallas_src>
import numpy as np

import jax
import jax.numpy as jnp
from jax.experimental import pallas as pl
from jax.experimental.pallas import tpu as pltpu

EPS = 1e-5  # nn.LayerNorm default

_TARGET_TILE_BYTES = 8 * 1024 * 1024   # per input tile (capped by the VMEM budget below)
_MAX_BLOCK_ROWS = 8192


# --------------------------------------------------------------------------- kernels
def _layernorm_rows_kernel(x_ref, w_ref, b_ref, o_ref):
    """LayerNorm over the full last axis (used when D >= 128 or lane-packing not applicable)."""
    x = x_ref[...].astype(jnp.float32)
    mean = jnp.mean(x, axis=-1, keepdims=True)
    ex2 = jnp.mean(x * x, axis=-1, keepdims=True)          # fused single pass over the tile
    var = jnp.maximum(ex2 - mean * mean, 0.0)               # biased variance, like torch
    inv = jax.lax.rsqrt(var + EPS)
    y = (x - mean) * inv * w_ref[...].astype(jnp.float32) + b_ref[...].astype(jnp.float32)
    o_ref[...] = y.astype(o_ref.dtype)


def _layernorm_grouped_kernel(x_ref, w_ref, b_ref, a_ref, o_ref):
    """Lane-dense LayerNorm for small D (g = 128 // d logical rows packed per physical row).

    Segmented mean / E[x^2] are computed on the MXU: dot(x, A) with A the (g*d, g*d)
    block-diagonal averaging matrix (blocks = (1/d) * ones(d, d)).  The result is the
    per-group statistic already broadcast back to all d lanes of its group.
    A's entries (0 or 1/d, d a power of two) are exact in bf16, so a manual hi/lo bf16
    split of the f32 operand gives ~f32 accuracy with two cheap native bf16 MXU passes.
    """
    x = x_ref[...].astype(jnp.float32)      # (R, g*d)
    w = w_ref[...].astype(jnp.float32)      # (1, g*d)
    b = b_ref[...].astype(jnp.float32)      # (1, g*d)
    a = a_ref[...]                          # (g*d, g*d) bf16, block-diagonal averaging matrix

    def seg_mean(v):                        # per-group mean of v, broadcast to every lane
        hi = v.astype(jnp.bfloat16)
        lo = (v - hi.astype(jnp.float32)).astype(jnp.bfloat16)
        return (jnp.dot(hi, a, preferred_element_type=jnp.float32)
                + jnp.dot(lo, a, preferred_element_type=jnp.float32))

    mean = seg_mean(x)
    ex2 = seg_mean(x * x)                   # fused: one walk over the tile for both stats
    var = jnp.maximum(ex2 - mean * mean, 0.0)   # biased variance, like torch
    inv = jax.lax.rsqrt(var + EPS)
    o_ref[...] = ((x - mean) * inv * w + b).astype(o_ref.dtype)


# --------------------------------------------------------------------------- tiling helpers
def _round_up(v, m):
    return ((v + m - 1) // m) * m


def _round_down(v, m):
    return max(m, (v // m) * m)


def _vmem_limit_bytes():
    """Generation-aware scoped-VMEM cap: ~96 MiB on v5e/v6e (128 MiB), ~48 MiB on v7x (64 MiB)."""
    cap = None
    try:
        cap = getattr(pltpu.get_tpu_info(), "vmem_capacity_bytes", None)
    except Exception:
        cap = None
    if not cap:
        return 48 * 1024 * 1024  # conservative default, safe on every generation
    return min(96 * 1024 * 1024, (int(cap) * 3) // 4)


def _pick_block_rows(rows, width, itemsize, vmem_limit):
    row_align = 8 if itemsize >= 4 else (16 if itemsize == 2 else 32)
    if rows <= row_align:
        return rows  # single block == whole array (allowed: equals full dims)
    # Budget ~ 2x(in)+2x(out) double buffers + f32 intermediates  =>  ~10 tiles per limit.
    tile_budget = max(512 * 1024, min(_TARGET_TILE_BYTES, vmem_limit // 10))
    br = tile_budget // max(1, width * itemsize)
    br = _round_down(min(br, _MAX_BLOCK_ROWS, rows), row_align)
    # v7x megacore: make the single ("parallel",) grid axis split evenly across the 2 TCs.
    n_blocks = -(-rows // br)
    if n_blocks == 1 and rows >= 2 * row_align:
        n_blocks = 2
    if n_blocks > 1:
        n_blocks = _round_up(n_blocks, 2)
        br = min(br, _round_up(-(-rows // n_blocks), row_align))
    return max(row_align, br)


# --------------------------------------------------------------------------- wrapper
def normalization_forward(x, weight, bias, *, block_rows=None):
    """LayerNorm over the last axis of `x`, matching the PyTorch Normalization module."""
    orig_shape = x.shape
    d = orig_shape[-1]
    x2 = x.reshape(-1, d)
    n_valid_rows = x2.shape[0]
    n_rows = n_valid_rows

    # Lane-dense packing for small embedding dims (pure row-major reshape, no data movement).
    g = 1
    if 0 < d < 128 and 128 % d == 0:
        g = 128 // d
    # TODO(synk): when d < 128 but 128 % d != 0, pad the feature dim to the next divisor of
    # 128 and mask gamma/beta so the lane-dense path is always taken; currently such shapes
    # use the (correct but lane-sparse) row kernel.

    if g > 1 and n_rows % g != 0:
        # Keep the 128-lane packed path for ragged row counts: pad < g rows instead of
        # falling back to width-d (lane-sparse) blocks.  Padded rows are sliced off below.
        pad = (-n_rows) % g
        x2 = jnp.pad(x2, ((0, pad), (0, 0)))
        n_rows += pad

    width = g * d
    rows = n_rows // g

    args = []
    in_specs = []
    if g > 1:
        x2 = x2.reshape(rows, width)
        w2 = jnp.tile(weight.reshape(1, d), (1, g)).astype(weight.dtype)
        b2 = jnp.tile(bias.reshape(1, d), (1, g)).astype(bias.dtype)
        # Compile-time block-diagonal averaging matrix; 1/d exact in bf16 (d is a power of 2).
        avg_np = np.kron(np.eye(g, dtype=np.float32),
                         np.full((d, d), 1.0 / d, dtype=np.float32))
        avg = jnp.asarray(avg_np, dtype=jnp.bfloat16)
        kern = _layernorm_grouped_kernel
    else:
        w2 = weight.reshape(1, d)
        b2 = bias.reshape(1, d)
        avg = None
        kern = _layernorm_rows_kernel

    itemsize = jnp.dtype(x.dtype).itemsize
    vmem_limit = _vmem_limit_bytes()
    if block_rows is None:
        block_rows = _pick_block_rows(rows, width, itemsize, vmem_limit)

    in_specs = [
        pl.BlockSpec((block_rows, width), lambda i: (i, 0)),   # x
        pl.BlockSpec((1, width), lambda i: (0, 0)),            # weight
        pl.BlockSpec((1, width), lambda i: (0, 0)),            # bias
    ]
    args = [x2, w2, b2]
    if g > 1:
        in_specs.append(pl.BlockSpec((width, width), lambda i: (0, 0)))  # averaging matrix
        args.append(avg)

    grid = (pl.cdiv(rows, block_rows),)
    out = pl.pallas_call(
        kern,
        out_shape=jax.ShapeDtypeStruct((rows, width), x.dtype),
        grid=grid,
        in_specs=in_specs,
        out_specs=pl.BlockSpec((block_rows, width), lambda i: (i, 0)),
        compiler_params=pltpu.CompilerParams(
            dimension_semantics=("parallel",),   # row axis shards across both TCs on v7x
            vmem_limit_bytes=vmem_limit,
        ),
    )(*args)

    out = out.reshape(-1, d)
    if out.shape[0] != n_valid_rows:
        out = out[:n_valid_rows]
    return out.reshape(orig_shape)


# --------------------------------------------------------------------------- demo / check
if __name__ == "__main__":
    key = jax.random.PRNGKey(0)
    batch, seq, embedding_dim = 2, 8, 32

    x = jax.random.normal(key, (batch, seq, embedding_dim), dtype=jnp.float32)

    # nn.LayerNorm default init: weight = 1, bias = 0 (deterministic).
    weight = jnp.ones((embedding_dim,), dtype=jnp.float32)
    bias = jnp.zeros((embedding_dim,), dtype=jnp.float32)

    y = jax.block_until_ready(normalization_forward(x, weight, bias))

    # Sanity check against a plain-JAX reference (two-pass variance).  Tolerance accounts
    # for the kernel's fused E[x^2]-mean^2 variance and bf16-split MXU reductions.
    x2 = x.reshape(-1, embedding_dim)
    mean = jnp.mean(x2, axis=-1, keepdims=True)
    var = jnp.mean((x2 - mean) ** 2, axis=-1, keepdims=True)
    ref = ((x2 - mean) * jax.lax.rsqrt(var + EPS) * weight + bias).reshape(x.shape)
    assert jnp.allclose(y, ref, atol=1e-4, rtol=1e-4), "mismatch vs reference"

    print("KERNEL_OK")
</pallas_src>

<mosaic_0001>
module attributes {stable_mosaic.version = 11 : i64} {
  func.func @_layernorm_grouped_kernel(%arg0: i32, %arg1: memref<4x128xf32, #tpu.memory_space<vmem>>, %arg2: memref<1x128xf32, #tpu.memory_space<vmem>>, %arg3: memref<1x128xf32, #tpu.memory_space<vmem>>, %arg4: memref<128x128xbf16, #tpu.memory_space<vmem>>, %arg5: memref<4x128xf32, #tpu.memory_space<vmem>>) attributes {dimension_semantics = [#tpu.dimension_semantics<parallel>], iteration_bounds = array<i64: 1>, scalar_prefetch = 0 : i64, scratch_operands = 0 : i64, tpu.core_type = #tpu.core_type<tc>, window_params = [{transform_indices = @transform_0, window_bounds = array<i64: 4, 128>}, {pipeline_mode = #tpu.pipeline_mode<synchronous>, transform_indices = @transform_1, window_bounds = array<i64: 1, 128>}, {pipeline_mode = #tpu.pipeline_mode<synchronous>, transform_indices = @transform_2, window_bounds = array<i64: 1, 128>}, {pipeline_mode = #tpu.pipeline_mode<synchronous>, transform_indices = @transform_3, window_bounds = array<i64: 128, 128>}, {transform_indices = @transform_4, window_bounds = array<i64: 4, 128>}]} {
    %c0 = arith.constant 0 : index
    %c0_0 = arith.constant 0 : index
    %0 = vector.load %arg1[%c0, %c0_0] : memref<4x128xf32, #tpu.memory_space<vmem>>, vector<4x128xf32>
    %c0_1 = arith.constant 0 : index
    %c0_2 = arith.constant 0 : index
    %1 = vector.load %arg2[%c0_1, %c0_2] : memref<1x128xf32, #tpu.memory_space<vmem>>, vector<1x128xf32>
    %c0_3 = arith.constant 0 : index
    %c0_4 = arith.constant 0 : index
    %2 = vector.load %arg3[%c0_3, %c0_4] : memref<1x128xf32, #tpu.memory_space<vmem>>, vector<1x128xf32>
    %c0_5 = arith.constant 0 : index
    %c0_6 = arith.constant 0 : index
    %3 = vector.load %arg4[%c0_5, %c0_6] : memref<128x128xbf16, #tpu.memory_space<vmem>>, vector<128x128xbf16>
    %4 = arith.truncf %0 : vector<4x128xf32> to vector<4x128xbf16>
    %5 = arith.extf %4 : vector<4x128xbf16> to vector<4x128xf32>
    %6 = arith.subf %0, %5 : vector<4x128xf32>
    %7 = arith.truncf %6 : vector<4x128xf32> to vector<4x128xbf16>
    %cst = arith.constant dense<0.000000e+00> : vector<4x128xf32>
    %8 = tpu.matmul %4, %3, %cst {dimension_numbers = #tpu.dot_dimension_numbers<[1], [0], [0], [1], [0, 0, 1, 1], [], []>} : vector<4x128xbf16>, vector<128x128xbf16>, vector<4x128xf32> -> vector<4x128xf32>
    %cst_7 = arith.constant dense<0.000000e+00> : vector<4x128xf32>
    %9 = tpu.matmul %7, %3, %cst_7 {dimension_numbers = #tpu.dot_dimension_numbers<[1], [0], [0], [1], [0, 0, 1, 1], [], []>} : vector<4x128xbf16>, vector<128x128xbf16>, vector<4x128xf32> -> vector<4x128xf32>
    %10 = arith.addf %8, %9 : vector<4x128xf32>
    %11 = arith.mulf %0, %0 : vector<4x128xf32>
    %12 = arith.truncf %11 : vector<4x128xf32> to vector<4x128xbf16>
    %13 = arith.extf %12 : vector<4x128xbf16> to vector<4x128xf32>
    %14 = arith.subf %11, %13 : vector<4x128xf32>
    %15 = arith.truncf %14 : vector<4x128xf32> to vector<4x128xbf16>
    %cst_8 = arith.constant dense<0.000000e+00> : vector<4x128xf32>
    %16 = tpu.matmul %12, %3, %cst_8 {dimension_numbers = #tpu.dot_dimension_numbers<[1], [0], [0], [1], [0, 0, 1, 1], [], []>} : vector<4x128xbf16>, vector<128x128xbf16>, vector<4x128xf32> -> vector<4x128xf32>
    %cst_9 = arith.constant dense<0.000000e+00> : vector<4x128xf32>
    %17 = tpu.matmul %15, %3, %cst_9 {dimension_numbers = #tpu.dot_dimension_numbers<[1], [0], [0], [1], [0, 0, 1, 1], [], []>} : vector<4x128xbf16>, vector<128x128xbf16>, vector<4x128xf32> -> vector<4x128xf32>
    %18 = arith.addf %16, %17 : vector<4x128xf32>
    %19 = arith.mulf %10, %10 : vector<4x128xf32>
    %20 = arith.subf %18, %19 : vector<4x128xf32>
    %cst_10 = arith.constant 0.000000e+00 : f32
    %21 = vector.broadcast %cst_10 : f32 to vector<4x128xf32>
    %22 = arith.maximumf %20, %21 : vector<4x128xf32>
    %cst_11 = arith.constant 9.99999974E-6 : f32
    %23 = vector.broadcast %cst_11 : f32 to vector<4x128xf32>
    %24 = arith.addf %22, %23 : vector<4x128xf32>
    %25 = math.rsqrt %24 : vector<4x128xf32>
    %26 = arith.subf %0, %10 : vector<4x128xf32>
    %27 = arith.mulf %26, %25 : vector<4x128xf32>
    %28 = vector.broadcast %1 : vector<1x128xf32> to vector<4x128xf32>
    %29 = arith.mulf %27, %28 : vector<4x128xf32>
    %30 = vector.broadcast %2 : vector<1x128xf32> to vector<4x128xf32>
    %31 = arith.addf %29, %30 : vector<4x128xf32>
    %c0_12 = arith.constant 0 : index
    %c0_13 = arith.constant 0 : index
    %32 = vector.load %arg5[%c0_12, %c0_13] : memref<4x128xf32, #tpu.memory_space<vmem>>, vector<4x128xf32>
    tpu.vector_store %arg5[%c0_12, %c0_13], %31 {strides = array<i32>} : memref<4x128xf32, #tpu.memory_space<vmem>>, vector<4x128xf32>,
    return
  }
  func.func @transform_0(%arg0: i32) -> (i32, i32) {
    %c0_i32 = arith.constant 0 : i32
    %c0_i32_0 = arith.constant 0 : i32
    return %arg0, %c0_i32 : i32, i32
  }
  func.func @transform_1(%arg0: i32) -> (i32, i32) {
    %c0_i32 = arith.constant 0 : i32
    %c0_i32_0 = arith.constant 0 : i32
    %c0_i32_1 = arith.constant 0 : i32
    return %c0_i32, %c0_i32_0 : i32, i32
  }
  func.func @transform_2(%arg0: i32) -> (i32, i32) {
    %c0_i32 = arith.constant 0 : i32
    %c0_i32_0 = arith.constant 0 : i32
    %c0_i32_1 = arith.constant 0 : i32
    return %c0_i32, %c0_i32_0 : i32, i32
  }
  func.func @transform_3(%arg0: i32) -> (i32, i32) {
    %c0_i32 = arith.constant 0 : i32
    %c0_i32_0 = arith.constant 0 : i32
    %c0_i32_1 = arith.constant 0 : i32
    return %c0_i32, %c0_i32_0 : i32, i32
  }
  func.func @transform_4(%arg0: i32) -> (i32, i32) {
    %c0_i32 = arith.constant 0 : i32
    %c0_i32_0 = arith.constant 0 : i32
    return %arg0, %c0_i32 : i32, i32
  }
}

</mosaic_0001>

<llo_original>
// kernel: tpu_custom_call.1
$region0: #{tpu_custom_call.1}
  #allocation0 [shape = 'u32[]', space=smem, size = 0x4, offset = 0x4, fixed_abs, tag = 'smem constant byte address 0x4 - core index']
  #allocation1 [shape = 'u32[144,128]{1,0:T(1,128)}', space=vmem, size = 0x12000, scoped, tag = 'internal scratch']
  %s0 = inlined_call_operand.hbm [shape: f32[4,128], index: 0, kind: input, shape index: {}]
  %s1 = inlined_call_operand.vmem [shape: f32[1,128], index: 1, kind: input, shape index: {}]
  %s2 = inlined_call_operand.vmem [shape: f32[1,128], index: 2, kind: input, shape index: {}]
  %s3 = inlined_call_operand.hbm [shape: bf16[128,128], index: 3, kind: input, shape index: {}]
  %s4 = inlined_call_operand.hbm [shape: f32[4,128], index: 4, kind: output, shape index: {}]
  %s5 = sld [smem:[#allocation0]]
  $region34: #{tpu_custom_call.1} parent=0
    _
  %s7 = ssub.s32 1, %s5
  %s8 = scalar_select 0, %s7, %s5
  $region1: #{tpu_custom_call.1} parent=0
    #allocation2 [shape = 'u8[2048]{0}', space=vmem, size = 0x800, scoped, tag = 'input window, operand 0, single buffered']
    #allocation3 [shape = 's32[1]{0}', space=sflag, size = 0x4, scoped, tag = 'scoped memory for tpu_custom_call.1']
    #allocation4 [shape = 's32[1]{0}', space=sflag, size = 0x4, scoped, tag = 'scoped memory for tpu_custom_call.1']
    #allocation5 [shape = 'u8[32768]{0}', space=vmem, size = 0x8000, scoped, tag = 'input window, operand 3, single buffered']
    #allocation6 [shape = 's32[1]{0}', space=sflag, size = 0x4, scoped, tag = 'scoped memory for tpu_custom_call.1']
    #allocation7 [shape = 'u8[2048]{0}', space=vmem, size = 0x800, scoped, tag = 'output window, operand 0, single buffered']
    %9 = vsyncpa [#allocation3], 0
    %10 = vsyncpa [#allocation6], 0
    %11 = vsyncpa [#allocation4], 0
    // Predicated region
    $region2: #{tpu_custom_call.1} parent=1 // pred_check
      _
    $region3: #{tpu_custom_call.1} parent=1 // pred_check_branch
      %13 = sbr.rel (0) target = $region5
    $region4: #{tpu_custom_call.1} parent=1 // pred_region
      %s15 = ssub.s32 64, 64
      %16 = vsyncadd [#allocation3], %s15
      %s18 = sshll.u32 [#allocation2], 4
      %s19 = int_to_ptr.vmem [resolvable:$true] %s18
      %21 = dma.hbm_to_vmem [thread:$0]  %s0, 64, %s19, [#allocation3]
    $region5: #{tpu_custom_call.1} parent=1 // pred_fallthru
      _
    // Predicated region
    $region6: #{tpu_custom_call.1} parent=1 // pred_check
      _
    $region7: #{tpu_custom_call.1} parent=1 // pred_check_branch
      %23 = sbr.rel (0) target = $region9
    $region8: #{tpu_custom_call.1} parent=1 // pred_region
      _
    $region9: #{tpu_custom_call.1} parent=1 // pred_fallthru
      _
    // Predicated region
    $region10: #{tpu_custom_call.1} parent=1 // pred_check
      _
    $region11: #{tpu_custom_call.1} parent=1 // pred_check_branch
      %25 = sbr.rel (0) target = $region13
    $region12: #{tpu_custom_call.1} parent=1 // pred_region
      _
    $region13: #{tpu_custom_call.1} parent=1 // pred_fallthru
      _
    // Predicated region
    $region14: #{tpu_custom_call.1} parent=1 // pred_check
      _
    $region15: #{tpu_custom_call.1} parent=1 // pred_check_branch
      %27 = sbr.rel (0) target = $region17
    $region16: #{tpu_custom_call.1} parent=1 // pred_region
      %s29 = ssub.s32 1024, 1024
      %30 = vsyncadd [#allocation6], %s29
      %s31 = sshll.u32 [#allocation5], 4
      %s32 = int_to_ptr.vmem [resolvable:$true] %s31
      %37 = dma.hbm_to_vmem [thread:$0]  %s3, 1024, %s32, [#allocation6], 64, 64, 4
    $region17: #{tpu_custom_call.1} parent=1 // pred_fallthru
      _
    // Predicated region
    $region18: #{tpu_custom_call.1} parent=1 // pred_check
      _
    $region19: #{tpu_custom_call.1} parent=1 // pred_check_branch
      %39 = sbr.rel (0) target = $region21
    $region20: #{tpu_custom_call.1} parent=1 // pred_region
      %40 = dma.done [#allocation3], 64
    $region21: #{tpu_custom_call.1} parent=1 // pred_fallthru
      _
    // Predicated region
    $region22: #{tpu_custom_call.1} parent=1 // pred_check
      _
    $region23: #{tpu_custom_call.1} parent=1 // pred_check_branch
      %42 = sbr.rel (0) target = $region25
    $region24: #{tpu_custom_call.1} parent=1 // pred_region
      %43 = dma.done [#allocation6], 1024
    $region25: #{tpu_custom_call.1} parent=1 // pred_fallthru
      _
    %v45 = vld [vmem:[#allocation2] sm:$0xf]
    %v46 = vld [vmem:[%s1] sm:$0x1]
    %v47 = vld [vmem:[%s2] sm:$0x1]
    %v48 = vld [vmem:[#allocation5] sm:$0xf]
    %v49 = vld [vmem:[#allocation5 + $0x4] sm:$0xf]
    %v50 = vld [vmem:[#allocation5 + $0x8] sm:$0xf]
    %v51 = vld [vmem:[#allocation5 + $0xc] sm:$0xf]
    %v52 = vld [vmem:[#allocation5 + $0x10] sm:$0xf]
    %v53 = vld [vmem:[#allocation5 + $0x14] sm:$0xf]
    %v54 = vld [vmem:[#allocation5 + $0x18] sm:$0xf]
    %v55 = vld [vmem:[#allocation5 + $0x1c] sm:$0xf]
    %v56 = vld [vmem:[#allocation5 + $0x20] sm:$0xf]
    %v57 = vld [vmem:[#allocation5 + $0x24] sm:$0xf]
    %v58 = vld [vmem:[#allocation5 + $0x28] sm:$0xf]
    %v59 = vld [vmem:[#allocation5 + $0x2c] sm:$0xf]
    %v60 = vld [vmem:[#allocation5 + $0x30] sm:$0xf]
    %v61 = vld [vmem:[#allocation5 + $0x34] sm:$0xf]
    %v62 = vld [vmem:[#allocation5 + $0x38] sm:$0xf]
    %v63 = vld [vmem:[#allocation5 + $0x3c] sm:$0xf]
    %v64 = vpack.c.bf16 %v45, %v45
    %v65 = vunpack.c.l.bf16 %v64
    %v66 = vsub.f32 %v45, %v65
    %v67 = vpack.c.bf16 %v66, %v66
    %v84 = vunpack.c.l.b16 %v48
    %v85 = vunpack.c.l.b16 %v49
    %v86 = vunpack.c.l.b16 %v50
    %v87 = vunpack.c.l.b16 %v51
    %v88 = vunpack.c.l.b16 %v52
    %v89 = vunpack.c.l.b16 %v53
    %v90 = vunpack.c.l.b16 %v54
    %v91 = vunpack.c.l.b16 %v55
    %v92 = vunpack.c.l.b16 %v56
    %v93 = vunpack.c.l.b16 %v57
    %v94 = vunpack.c.l.b16 %v58
    %v95 = vunpack.c.l.b16 %v59
    %v96 = vunpack.c.l.b16 %v60
    %v97 = vunpack.c.l.b16 %v61
    %v98 = vunpack.c.l.b16 %v62
    %v99 = vunpack.c.l.b16 %v63
    %v100 = vpack.c.b16 %v85, %v84
    %v101 = vpack.c.b16 %v87, %v86
    %v102 = vpack.c.b16 %v89, %v88
    %v103 = vpack.c.b16 %v91, %v90
    %v104 = vpack.c.b16 %v93, %v92
    %v105 = vpack.c.b16 %v95, %v94
    %v106 = vpack.c.b16 %v97, %v96
    %v107 = vpack.c.b16 %v99, %v98
    %116 = vmatprep.subr.bf16.mxu0 0
    %117 = vmatpush1.bf16.msra.mxu0 %v107
    %118 = vmatprep.subr.bf16.mxu0 0
    %119 = vmatpush1.bf16.msra.mxu0 %v106
    %120 = vmatprep.subr.bf16.mxu0 0
    %121 = vmatpush1.bf16.msra.mxu0 %v105
    %122 = vmatprep.subr.bf16.mxu0 0
    %123 = vmatpush1.bf16.msra.mxu0 %v104
    %124 = vmatprep.subr.bf16.mxu0 0
    %125 = vmatpush1.bf16.msra.mxu0 %v103
    %126 = vmatprep.subr.bf16.mxu0 0
    %127 = vmatpush1.bf16.msra.mxu0 %v102
    %128 = vmatprep.subr.bf16.mxu0 0
    %129 = vmatpush1.bf16.msra.mxu0 %v101
    %130 = vmatprep.subr.bf16.mxu0 0
    %131 = vmatpush1.bf16.msra.mxu0 %v100
    %132 = vmatprep.subr.bf16.mxu0 0
    %133 = vmatpush2.bf16.msra.mxu0 0
    %134 = vmatprep.subr.bf16.mxu0 0
    %135 = vmatpush2.bf16.msra.mxu0 0
    %136 = vmatprep.subr.bf16.mxu0 0
    %137 = vmatpush2.bf16.msra.mxu0 0
    %138 = vmatprep.subr.bf16.mxu0 0
    %139 = vmatpush2.bf16.msra.mxu0 0
    %140 = vmatprep.subr.bf16.mxu0 0
    %141 = vmatpush2.bf16.msra.mxu0 0
    %142 = vmatprep.subr.bf16.mxu0 0
    %143 = vmatpush2.bf16.msra.mxu0 0
    %144 = vmatprep.subr.bf16.mxu0 0
    %145 = vmatpush2.bf16.msra.mxu0 0
    %146 = vmatprep.subr.bf16.mxu0 0
    %147 = vmatpush2.bf16.msra.mxu0 0
    %148 = vmatprep.mubr.bf16.mxu0 0
    %149 = vmatmul.mubr.bf16.gmra.mxu0 %v67
    %v150 = vpop.f32.mrf.mxu0
    %v151 = vadd.f32 0.0, %v150
    %v152 = vpop.f32.mrf.mxu0
    %v153 = vpop.f32.mrf.mxu0
    %v154 = vpop.f32.mrf.mxu0
    %155 = vdwg.mxu0
    %156 = vmatprep.subr.bf16.mxu0 0
    %157 = vmatpush1.bf16.msra.mxu0 %v107
    %158 = vmatprep.subr.bf16.mxu0 0
    %159 = vmatpush1.bf16.msra.mxu0 %v106
    %160 = vmatprep.subr.bf16.mxu0 0
    %161 = vmatpush1.bf16.msra.mxu0 %v105
    %162 = vmatprep.subr.bf16.mxu0 0
    %163 = vmatpush1.bf16.msra.mxu0 %v104
    %164 = vmatprep.subr.bf16.mxu0 0
    %165 = vmatpush1.bf16.msra.mxu0 %v103
    %166 = vmatprep.subr.bf16.mxu0 0
    %167 = vmatpush1.bf16.msra.mxu0 %v102
    %168 = vmatprep.subr.bf16.mxu0 0
    %169 = vmatpush1.bf16.msra.mxu0 %v101
    %170 = vmatprep.subr.bf16.mxu0 0
    %171 = vmatpush1.bf16.msra.mxu0 %v100
    %172 = vmatprep.subr.bf16.mxu0 0
    %173 = vmatpush2.bf16.msra.mxu0 0
    %174 = vmatprep.subr.bf16.mxu0 0
    %175 = vmatpush2.bf16.msra.mxu0 0
    %176 = vmatprep.subr.bf16.mxu0 0
    %177 = vmatpush2.bf16.msra.mxu0 0
    %178 = vmatprep.subr.bf16.mxu0 0
    %179 = vmatpush2.bf16.msra.mxu0 0
    %180 = vmatprep.subr.bf16.mxu0 0
    %181 = vmatpush2.bf16.msra.mxu0 0
    %182 = vmatprep.subr.bf16.mxu0 0
    %183 = vmatpush2.bf16.msra.mxu0 0
    %184 = vmatprep.subr.bf16.mxu0 0
    %185 = vmatpush2.bf16.msra.mxu0 0
    %186 = vmatprep.subr.bf16.mxu0 0
    %187 = vmatpush2.bf16.msra.mxu0 0
    %188 = vmatprep.mubr.bf16.mxu0 0
    %189 = vmatmul.mubr.bf16.gmra.mxu0 %v64
    %v190 = vpop.f32.mrf.mxu0
    %v191 = vadd.f32 %v151, %v190
    %v192 = vpop.f32.mrf.mxu0
    %v193 = vpop.f32.mrf.mxu0
    %v194 = vpop.f32.mrf.mxu0
    %195 = vdwg.mxu0
    %v196 = vmul.f32 %v45, %v45
    %v197 = vpack.c.bf16 %v196, %v196
    %v198 = vunpack.c.l.bf16 %v197
    %v199 = vsub.f32 %v196, %v198
    %v200 = vpack.c.bf16 %v199, %v199
    %201 = vmatprep.subr.bf16.mxu0 0
    %202 = vmatpush1.bf16.msra.mxu0 %v107
    %203 = vmatprep.subr.bf16.mxu0 0
    %204 = vmatpush1.bf16.msra.mxu0 %v106
    %205 = vmatprep.subr.bf16.mxu0 0
    %206 = vmatpush1.bf16.msra.mxu0 %v105
    %207 = vmatprep.subr.bf16.mxu0 0
    %208 = vmatpush1.bf16.msra.mxu0 %v104
    %209 = vmatprep.subr.bf16.mxu0 0
    %210 = vmatpush1.bf16.msra.mxu0 %v103
    %211 = vmatprep.subr.bf16.mxu0 0
    %212 = vmatpush1.bf16.msra.mxu0 %v102
    %213 = vmatprep.subr.bf16.mxu0 0
    %214 = vmatpush1.bf16.msra.mxu0 %v101
    %215 = vmatprep.subr.bf16.mxu0 0
    %216 = vmatpush1.bf16.msra.mxu0 %v100
    %217 = vmatprep.subr.bf16.mxu0 0
    %218 = vmatpush2.bf16.msra.mxu0 0
    %219 = vmatprep.subr.bf16.mxu0 0
    %220 = vmatpush2.bf16.msra.mxu0 0
    %221 = vmatprep.subr.bf16.mxu0 0
    %222 = vmatpush2.bf16.msra.mxu0 0
    %223 = vmatprep.subr.bf16.mxu0 0
    %224 = vmatpush2.bf16.msra.mxu0 0
    %225 = vmatprep.subr.bf16.mxu0 0
    %226 = vmatpush2.bf16.msra.mxu0 0
    %227 = vmatprep.subr.bf16.mxu0 0
    %228 = vmatpush2.bf16.msra.mxu0 0
    %229 = vmatprep.subr.bf16.mxu0 0
    %230 = vmatpush2.bf16.msra.mxu0 0
    %231 = vmatprep.subr.bf16.mxu0 0
    %232 = vmatpush2.bf16.msra.mxu0 0
    %233 = vmatprep.mubr.bf16.mxu0 0
    %234 = vmatmul.mubr.bf16.gmra.mxu0 %v200
    %v235 = vpop.f32.mrf.mxu0
    %v236 = vadd.f32 0.0, %v235
    %v237 = vpop.f32.mrf.mxu0
    %v238 = vpop.f32.mrf.mxu0
    %v239 = vpop.f32.mrf.mxu0
    %240 = vdwg.mxu0
    %241 = vmatprep.subr.bf16.mxu0 0
    %242 = vmatpush1.bf16.msra.mxu0 %v107
    %243 = vmatprep.subr.bf16.mxu0 0
    %244 = vmatpush1.bf16.msra.mxu0 %v106
    %245 = vmatprep.subr.bf16.mxu0 0
    %246 = vmatpush1.bf16.msra.mxu0 %v105
    %247 = vmatprep.subr.bf16.mxu0 0
    %248 = vmatpush1.bf16.msra.mxu0 %v104
    %249 = vmatprep.subr.bf16.mxu0 0
    %250 = vmatpush1.bf16.msra.mxu0 %v103
    %251 = vmatprep.subr.bf16.mxu0 0
    %252 = vmatpush1.bf16.msra.mxu0 %v102
    %253 = vmatprep.subr.bf16.mxu0 0
    %254 = vmatpush1.bf16.msra.mxu0 %v101
    %255 = vmatprep.subr.bf16.mxu0 0
    %256 = vmatpush1.bf16.msra.mxu0 %v100
    %257 = vmatprep.subr.bf16.mxu0 0
    %258 = vmatpush2.bf16.msra.mxu0 0
    %259 = vmatprep.subr.bf16.mxu0 0
    %260 = vmatpush2.bf16.msra.mxu0 0
    %261 = vmatprep.subr.bf16.mxu0 0
    %262 = vmatpush2.bf16.msra.mxu0 0
    %263 = vmatprep.subr.bf16.mxu0 0
    %264 = vmatpush2.bf16.msra.mxu0 0
    %265 = vmatprep.subr.bf16.mxu0 0
    %266 = vmatpush2.bf16.msra.mxu0 0
    %267 = vmatprep.subr.bf16.mxu0 0
    %268 = vmatpush2.bf16.msra.mxu0 0
    %269 = vmatprep.subr.bf16.mxu0 0
    %270 = vmatpush2.bf16.msra.mxu0 0
    %271 = vmatprep.subr.bf16.mxu0 0
    %272 = vmatpush2.bf16.msra.mxu0 0
    %273 = vmatprep.mubr.bf16.mxu0 0
    %274 = vmatmul.mubr.bf16.gmra.mxu0 %v197
    %v275 = vpop.f32.mrf.mxu0
    %v276 = vadd.f32 %v236, %v275
    %v277 = vpop.f32.mrf.mxu0
    %v278 = vpop.f32.mrf.mxu0
    %v279 = vpop.f32.mrf.mxu0
    %280 = vdwg.mxu0
    %v281 = vmul.f32 %v191, %v191
    %v282 = vsub.f32 %v276, %v281
    %v283 = vmax.f32 %v282, 0.0
    %v284 = vadd.f32 %v283, 1e-05
    %v285 = vrsqrt.pop %v284
    %v286 = vsub.f32 %v45, %v191
    %v287 = vmul.f32 %v286, %v285
    %v289 = vlaneseq
    %v290 = vshrl.u32 %v289, 7
    %v291 = vsub.s32 0, %v290
    %v292 = vrot.slane %v46, %v291
    %v294 = vmul.f32 %v287, %v292
    %v296 = vlaneseq
    %v297 = vshrl.u32 %v296, 7
    %v298 = vsub.s32 0, %v297
    %v299 = vrot.slane %v47, %v298
    %v301 = vadd.f32 %v294, %v299
    %302 = vst [vmem:[#allocation7] sm:$0xf] %v301
    // Predicated region
    $region26: #{tpu_custom_call.1} parent=1 // pred_check
      _
    $region27: #{tpu_custom_call.1} parent=1 // pred_check_branch
      %304 = sbr.rel (0) target = $region29
    $region28: #{tpu_custom_call.1} parent=1 // pred_region
      %s306 = ssub.s32 64, 64
      %307 = vsyncadd [#allocation4], %s306
      %s309 = sshll.u32 [#allocation7], 4
      %s310 = int_to_ptr.vmem [resolvable:$true] %s309
      %312 = dma.vmem_to_hbm [thread:$0]  %s310, 64, %s4, [#allocation4]
    $region29: #{tpu_custom_call.1} parent=1 // pred_fallthru
      _
    // Predicated region
    $region30: #{tpu_custom_call.1} parent=1 // pred_check
      _
    $region31: #{tpu_custom_call.1} parent=1 // pred_check_branch
      %314 = sbr.rel (0) target = $region33
    $region32: #{tpu_custom_call.1} parent=1 // pred_region
      %315 = dma.done [#allocation4], 64
    $region33: #{tpu_custom_call.1} parent=1 // pred_fallthru
      _
    %316 = vsyncpa [#allocation3], 1
    %317 = vsyncpa [#allocation6], 1
    %318 = vsyncpa [#allocation4], 1

</llo_original>
